<compile_context>
chip_gen: v6e
topology: v6e:2x2x1
jax: 0.10.0
libtpu: 0.0.40
codegen_flags: <defaults>
</compile_context>

<pallas_src>
import jax
import jax.numpy as jnp
from jax.experimental import pallas as pl
from jax.experimental.pallas import tpu as pltpu


def _round_up(x: int, m: int) -> int:
    return (x + m - 1) // m * m


def _choose_tile(dim: int, max_tile: int, align: int) -> int:
    """Largest tile <= max_tile that is a multiple of `align` and (preferably)
    divides the align-rounded dim, so no padding beyond alignment is needed."""
    max_tile = max(align, max_tile - max_tile % align)
    dim_a = _round_up(dim, align)
    if dim_a <= max_tile:
        return dim_a
    t = max_tile
    floor = max(align, max_tile // 4)  # don't accept tiny tiles; pad instead
    while t >= floor:
        if dim_a % t == 0:
            return t
        t -= align
    return max_tile  # no good divisor: dim gets padded up to a tile multiple


def _pick_tile_caps():
    """Per-generation tile caps + scoped-VMEM limit, from the roofline
    crossover (tm*tn/(tm+tn) FLOP/B vs MXU-TF/s / HBM-BW)."""
    try:
        kind = jax.devices()[0].device_kind.lower()
    except Exception:
        kind = ""
    if "v7" in kind or "tpu7" in kind:
        # 64 MiB per-TC physical / 32 MiB scoped default; ~620 FLOP/B needed.
        return dict(tm=1024, tn=2048, tk=512, vmem=48 << 20, is_v7x=True)
    if "v6" in kind:
        # 128 MiB physical / 32 MiB scoped default; ~675 FLOP/B needed.
        return dict(tm=1024, tn=2048, tk=1024, vmem=64 << 20, is_v7x=False)
    if "v5 lite" in kind or "v5e" in kind or "v5litepod" in kind:
        # ~240 FLOP/B needed; stays inside the 16 MiB scoped default.
        return dict(tm=512, tn=512, tk=1024, vmem=None, is_v7x=False)
    # Unknown / v4 / v5p: conservative but still well above 256 FLOP/B.
    return dict(tm=512, tn=1024, tk=512, vmem=None, is_v7x=False)


def _float16_module_kernel(x_ref, w_ref, b_ref, o_ref, acc_ref):
    k = pl.program_id(2)

    # k==0: init the fp32 accumulator with the (fp32-upcast) bias folded in.
    @pl.when(k == 0)
    def _init():
        acc_ref[...] = jnp.broadcast_to(
            b_ref[...].astype(jnp.float32), acc_ref.shape
        )

    # Steady state: bf16 MXU matmul with fp32 accumulation.  If x arrives in
    # fp32 (fp32_to_float16 not hoisted), the cast to bf16 happens here on the
    # VPU and is hidden under the MXU.
    acc_ref[...] += jnp.dot(
        x_ref[...].astype(jnp.bfloat16),
        w_ref[...],
        preferred_element_type=jnp.float32,
    )

    # Last K step: single bf16 round (wrapped bf16 module's output), then
    # float16_to_fp32 upcast for the pipeline-last-stage boundary.
    @pl.when(k == pl.num_programs(2) - 1)
    def _finalize():
        o_ref[...] = acc_ref[...].astype(jnp.bfloat16).astype(jnp.float32)


def float16_module_forward(x_f32, w_bf16, b_bf16):
    """Float16Module.forward(x) where the wrapped module is a Linear layer.

    x_f32:   [S, B, K] float32   (Megatron [seq, batch, hidden] layout)
    w_bf16:  [K, N]    bfloat16  (module weights after .bfloat16(), [in, out])
    b_bf16:  [1, N]    bfloat16
    returns: [S, B, N] float32
    """
    S, B, K = x_f32.shape
    N = w_bf16.shape[1]
    M = S * B

    caps = _pick_tile_caps()

    # Divisor-friendly tiles (no padding for production Megatron shapes).
    tm = _choose_tile(M, caps["tm"], 8)
    tn = _choose_tile(N, caps["tn"], 128)
    tk = _choose_tile(K, caps["tk"], 128)

    Mp, Np, Kp = _round_up(M, tm), _round_up(N, tn), _round_up(K, tk)

    # v7x skinny-M (decode): if the i axis has a single tile, split the j axis
    # so both TensorCores get work (parallel j sharding).
    if caps["is_v7x"] and Mp // tm == 1 and Np // tn == 1 and Np % 256 == 0:
        tn = Np // 2

    grid_i, grid_j, grid_k = Mp // tm, Np // tn, Kp // tk

    # fp32_to_float16: hoist the cast only when x is re-fetched >= 4 times,
    # otherwise stream fp32 and cast per-tile inside the kernel (cheaper HBM).
    hoist_cast = grid_j >= 4
    x2d = x_f32.reshape(M, K)
    if hoist_cast:
        x2d = x2d.astype(jnp.bfloat16)
    x_itemsize = 2 if hoist_cast else 4

    # Pad only when shapes are not tile multiples (exact for the GEMM).
    if (Mp, Kp) != (M, K):
        x2d = jnp.pad(x2d, ((0, Mp - M), (0, Kp - K)))
    w = w_bf16 if (Kp, Np) == (K, N) else jnp.pad(
        w_bf16, ((0, Kp - K), (0, Np - N))
    )
    b = b_bf16 if Np == N else jnp.pad(b_bf16, ((0, 0), (0, Np - N)))

    # Deeper buffering on W only when pure weight-streaming (skinny M) and the
    # K loop is deep enough for 3 buffers to matter.
    w_spec_kwargs = {}
    if grid_i == 1 and grid_k >= 3:
        w_spec_kwargs["pipeline_mode"] = pl.Buffered(3)
    w_spec = pl.BlockSpec((tk, tn), lambda i, j, k: (k, j), **w_spec_kwargs)

    # True HBM traffic of this schedule (x re-fetched grid_j times, W grid_i
    # times, output written once, bias negligible).
    bytes_accessed = (
        grid_j * Mp * Kp * x_itemsize
        + grid_i * Kp * Np * 2
        + Mp * Np * 4
        + Np * 2
    )

    out2d = pl.pallas_call(
        _float16_module_kernel,
        out_shape=jax.ShapeDtypeStruct((Mp, Np), jnp.float32),
        grid_spec=pltpu.PrefetchScalarGridSpec(
            num_scalar_prefetch=0,
            grid=(grid_i, grid_j, grid_k),
            in_specs=[
                pl.BlockSpec((tm, tk), lambda i, j, k: (i, k)),  # x (fp32|bf16)
                w_spec,                                          # W (bf16)
                pl.BlockSpec((1, tn), lambda i, j, k: (0, j)),   # bias (bf16)
            ],
            out_specs=pl.BlockSpec((tm, tn), lambda i, j, k: (i, j)),
            scratch_shapes=[pltpu.VMEM((tm, tn), jnp.float32)],
        ),
        compiler_params=pltpu.CompilerParams(
            dimension_semantics=("parallel", "parallel", "arbitrary"),
            vmem_limit_bytes=caps["vmem"],
        ),
        cost_estimate=pl.CostEstimate(
            flops=2 * Mp * Np * Kp,
            transcendentals=0,
            bytes_accessed=bytes_accessed,
        ),
    )(x2d, w, b)

    # Strip padding and restore Megatron [s, b, n] layout.
    return out2d[:M, :N].reshape(S, B, N)


if __name__ == "__main__":
    # Small shapes: seq=8, batch=2, hidden=32 (Megatron [s, b, h] convention).
    # Production Megatron hidden sizes are >=1024 and hit the divisor-friendly
    # (no-pad) tile path; H=32 pads up to one (8,128)-aligned tile and only
    # serves as a correctness check.
    S, B, H = 8, 2, 32
    key = jax.random.PRNGKey(0)
    kx, kw, kb = jax.random.split(key, 3)

    # fp32 input arriving at the pipeline-first stage.
    x = jax.random.normal(kx, (S, B, H), dtype=jnp.float32)

    # Wrapped-module parameters after the .bfloat16() conversion.
    w = (jax.random.normal(kw, (H, H), dtype=jnp.float32) * 0.05).astype(jnp.bfloat16)
    b = (jax.random.normal(kb, (1, H), dtype=jnp.float32) * 0.05).astype(jnp.bfloat16)

    out = float16_module_forward(x, w, b)
    out = jax.block_until_ready(out)

    # Reference: fp32->bf16 cast, bf16 linear (fp32 accum + fp32 bias), single
    # bf16 round, then bf16->fp32 upcast.
    x_bf16 = x.astype(jnp.bfloat16)
    ref_bf16 = (
        jnp.dot(x_bf16.reshape(S * B, H), w, preferred_element_type=jnp.float32)
        + b.astype(jnp.float32)
    ).astype(jnp.bfloat16)
    ref = ref_bf16.astype(jnp.float32).reshape(S, B, H)

    assert out.dtype == jnp.float32
    assert out.shape == (S, B, H)
    assert jnp.allclose(out, ref, atol=1e-2, rtol=1e-2)

    # TODO(synk): pipeline-stage gating (is_pipeline_first/last_stage),
    # set_input_tensor and state_dict / sharded_state_dict plumbing are
    # control-flow / checkpoint concerns with no kernel equivalent; the kernel
    # always applies both boundary casts.
    print("KERNEL_OK")
</pallas_src>

<mosaic_0001>
module attributes {stable_mosaic.version = 11 : i64} {
  func.func @_float16_module_kernel(%arg0: i32, %arg1: i32, %arg2: i32, %arg3: memref<16x128xf32, #tpu.memory_space<vmem>>, %arg4: memref<128x128xbf16, #tpu.memory_space<vmem>>, %arg5: memref<1x128xbf16, #tpu.memory_space<vmem>>, %arg6: memref<16x128xf32, #tpu.memory_space<vmem>>, %arg7: memref<16x128xf32, #tpu.memory_space<vmem>>) attributes {dimension_semantics = [#tpu.dimension_semantics<parallel>, #tpu.dimension_semantics<parallel>, #tpu.dimension_semantics<arbitrary>], iteration_bounds = array<i64: 1, 1, 1>, scalar_prefetch = 0 : i64, scratch_operands = 1 : i64, tpu.core_type = #tpu.core_type<tc>, window_params = [{transform_indices = @transform_0, window_bounds = array<i64: 16, 128>}, {transform_indices = @transform_1, window_bounds = array<i64: 128, 128>}, {transform_indices = @transform_2, window_bounds = array<i64: 1, 128>}, {transform_indices = @transform_3, window_bounds = array<i64: 16, 128>}]} {
    %c0_i32 = arith.constant 0 : i32
    %0 = arith.cmpi eq, %arg2, %c0_i32 : i32
    %1 = arith.extui %0 : i1 to i32
    %c0_i32_0 = arith.constant 0 : i32
    %2 = arith.cmpi ne, %1, %c0_i32_0 : i32
    scf.if %2 {
      %c0_10 = arith.constant 0 : index
      %c0_11 = arith.constant 0 : index
      %13 = vector.load %arg5[%c0_10, %c0_11] : memref<1x128xbf16, #tpu.memory_space<vmem>>, vector<1x128xbf16>
      %14 = arith.extf %13 : vector<1x128xbf16> to vector<1x128xf32>
      %15 = vector.shape_cast %14 : vector<1x128xf32> to vector<1x128xf32>
      %16 = vector.broadcast %15 : vector<1x128xf32> to vector<16x128xf32>
      %c0_12 = arith.constant 0 : index
      %c0_13 = arith.constant 0 : index
      %17 = vector.load %arg7[%c0_12, %c0_13] : memref<16x128xf32, #tpu.memory_space<vmem>>, vector<16x128xf32>
      tpu.vector_store %arg7[%c0_12, %c0_13], %16 {strides = array<i32>} : memref<16x128xf32, #tpu.memory_space<vmem>>, vector<16x128xf32>,
    } else {
    }
    %c0 = arith.constant 0 : index
    %c0_1 = arith.constant 0 : index
    %3 = vector.load %arg7[%c0, %c0_1] : memref<16x128xf32, #tpu.memory_space<vmem>>, vector<16x128xf32>
    %c0_2 = arith.constant 0 : index
    %c0_3 = arith.constant 0 : index
    %4 = vector.load %arg3[%c0_2, %c0_3] : memref<16x128xf32, #tpu.memory_space<vmem>>, vector<16x128xf32>
    %5 = arith.truncf %4 : vector<16x128xf32> to vector<16x128xbf16>
    %c0_4 = arith.constant 0 : index
    %c0_5 = arith.constant 0 : index
    %6 = vector.load %arg4[%c0_4, %c0_5] : memref<128x128xbf16, #tpu.memory_space<vmem>>, vector<128x128xbf16>
    %cst = arith.constant dense<0.000000e+00> : vector<16x128xf32>
    %7 = tpu.matmul %5, %6, %cst {dimension_numbers = #tpu.dot_dimension_numbers<[1], [0], [0], [1], [0, 0, 1, 1], [], []>} : vector<16x128xbf16>, vector<128x128xbf16>, vector<16x128xf32> -> vector<16x128xf32>
    %8 = arith.addf %3, %7 : vector<16x128xf32>
    %c0_6 = arith.constant 0 : index
    %c0_7 = arith.constant 0 : index
    %9 = vector.load %arg7[%c0_6, %c0_7] : memref<16x128xf32, #tpu.memory_space<vmem>>, vector<16x128xf32>
    tpu.vector_store %arg7[%c0_6, %c0_7], %8 {strides = array<i32>} : memref<16x128xf32, #tpu.memory_space<vmem>>, vector<16x128xf32>,
    %c0_i32_8 = arith.constant 0 : i32
    %10 = arith.cmpi eq, %arg2, %c0_i32_8 : i32
    %11 = arith.extui %10 : i1 to i32
    %c0_i32_9 = arith.constant 0 : i32
    %12 = arith.cmpi ne, %11, %c0_i32_9 : i32
    scf.if %12 {
      %c0_10 = arith.constant 0 : index
      %c0_11 = arith.constant 0 : index
      %13 = vector.load %arg7[%c0_10, %c0_11] : memref<16x128xf32, #tpu.memory_space<vmem>>, vector<16x128xf32>
      %14 = arith.truncf %13 : vector<16x128xf32> to vector<16x128xbf16>
      %15 = arith.extf %14 : vector<16x128xbf16> to vector<16x128xf32>
      %c0_12 = arith.constant 0 : index
      %c0_13 = arith.constant 0 : index
      %16 = vector.load %arg6[%c0_12, %c0_13] : memref<16x128xf32, #tpu.memory_space<vmem>>, vector<16x128xf32>
      tpu.vector_store %arg6[%c0_12, %c0_13], %15 {strides = array<i32>} : memref<16x128xf32, #tpu.memory_space<vmem>>, vector<16x128xf32>,
    } else {
    }
    return
  }
  func.func @transform_0(%arg0: i32, %arg1: i32, %arg2: i32) -> (i32, i32) {
    %c0_i32 = arith.constant 0 : i32
    return %arg0, %arg2 : i32, i32
  }
  func.func @transform_1(%arg0: i32, %arg1: i32, %arg2: i32) -> (i32, i32) {
    %c0_i32 = arith.constant 0 : i32
    return %arg2, %arg1 : i32, i32
  }
  func.func @transform_2(%arg0: i32, %arg1: i32, %arg2: i32) -> (i32, i32) {
    %c0_i32 = arith.constant 0 : i32
    %c0_i32_0 = arith.constant 0 : i32
    return %c0_i32, %arg1 : i32, i32
  }
  func.func @transform_3(%arg0: i32, %arg1: i32, %arg2: i32) -> (i32, i32) {
    %c0_i32 = arith.constant 0 : i32
    return %arg0, %arg1 : i32, i32
  }
}

</mosaic_0001>

<llo_original>
// kernel: tpu_custom_call.1
$region0: #{tpu_custom_call.1}
  #allocation0 [shape = 'u32[]', space=smem, size = 0x4, offset = 0x4, fixed_abs, tag = 'smem constant byte address 0x4 - core index']
  #allocation1 [shape = 'u32[144,128]{1,0:T(1,128)}', space=vmem, size = 0x12000, scoped, tag = 'internal scratch']
  #allocation2 [shape = 'f32[16,128]{1,0:T(8,128)}', space=vmem, size = 0x2000, scoped, tag = 'scratch operand']
  %s0 = inlined_call_operand.hbm [shape: f32[16,128], index: 0, kind: input, shape index: {}]
  %s1 = inlined_call_operand.hbm [shape: bf16[128,128], index: 1, kind: input, shape index: {}]
  %s2 = inlined_call_operand.vmem [shape: bf16[1,128], index: 2, kind: input, shape index: {}]
  %s3 = inlined_call_operand.hbm [shape: f32[16,128], index: 3, kind: output, shape index: {}]
  %s4 = sld [smem:[#allocation0]]
  $region38: #{tpu_custom_call.1} parent=0
    _
  %s6 = ssub.s32 1, %s4
  %s7 = scalar_select 0, %s6, %s4
  $region1: #{tpu_custom_call.1} parent=0
    #allocation3 [shape = 'u8[8192]{0}', space=vmem, size = 0x2000, scoped, tag = 'input window, operand 0, single buffered']
    #allocation4 [shape = 's32[1]{0}', space=sflag, size = 0x4, scoped, tag = 'scoped memory for tpu_custom_call.1']
    #allocation5 [shape = 's32[1]{0}', space=sflag, size = 0x4, scoped, tag = 'scoped memory for tpu_custom_call.1']
    #allocation6 [shape = 'u8[32768]{0}', space=vmem, size = 0x8000, scoped, tag = 'input window, operand 1, single buffered']
    #allocation7 [shape = 's32[1]{0}', space=sflag, size = 0x4, scoped, tag = 'scoped memory for tpu_custom_call.1']
    #allocation8 [shape = 'u8[8192]{0}', space=vmem, size = 0x2000, scoped, tag = 'output window, operand 0, single buffered']
    %8 = vsyncpa [#allocation4], 0
    %9 = vsyncpa [#allocation7], 0
    %10 = vsyncpa [#allocation5], 0
    // Predicated region
    $region2: #{tpu_custom_call.1} parent=1 // pred_check
      _
    $region3: #{tpu_custom_call.1} parent=1 // pred_check_branch
      %12 = sbr.rel (0) target = $region5
    $region4: #{tpu_custom_call.1} parent=1 // pred_region
      %s14 = ssub.s32 256, 256
      %15 = vsyncadd [#allocation4], %s14
      %s16 = sshll.u32 [#allocation3], 4
      %s17 = int_to_ptr.vmem [resolvable:$true] %s16
      %22 = dma.hbm_to_vmem [thread:$0]  %s0, 256, %s17, [#allocation4], 128, 128, 8
    $region5: #{tpu_custom_call.1} parent=1 // pred_fallthru
      _
    // Predicated region
    $region6: #{tpu_custom_call.1} parent=1 // pred_check
      _
    $region7: #{tpu_custom_call.1} parent=1 // pred_check_branch
      %24 = sbr.rel (0) target = $region9
    $region8: #{tpu_custom_call.1} parent=1 // pred_region
      %s26 = ssub.s32 1024, 1024
      %27 = vsyncadd [#allocation7], %s26
      %s28 = sshll.u32 [#allocation6], 4
      %s29 = int_to_ptr.vmem [resolvable:$true] %s28
      %34 = dma.hbm_to_vmem [thread:$0]  %s1, 1024, %s29, [#allocation7], 64, 64, 4
    $region9: #{tpu_custom_call.1} parent=1 // pred_fallthru
      _
    // Predicated region
    $region10: #{tpu_custom_call.1} parent=1 // pred_check
      _
    $region11: #{tpu_custom_call.1} parent=1 // pred_check_branch
      %36 = sbr.rel (0) target = $region13
    $region12: #{tpu_custom_call.1} parent=1 // pred_region
      _
    $region13: #{tpu_custom_call.1} parent=1 // pred_fallthru
      _
    // Predicated region
    $region14: #{tpu_custom_call.1} parent=1 // pred_check
      _
    $region15: #{tpu_custom_call.1} parent=1 // pred_check_branch
      %38 = sbr.rel (0) target = $region17
    $region16: #{tpu_custom_call.1} parent=1 // pred_region
      %39 = dma.done [#allocation4], 256
    $region17: #{tpu_custom_call.1} parent=1 // pred_fallthru
      _
    // Predicated region
    $region18: #{tpu_custom_call.1} parent=1 // pred_check
      _
    $region19: #{tpu_custom_call.1} parent=1 // pred_check_branch
      %41 = sbr.rel (0) target = $region21
    $region20: #{tpu_custom_call.1} parent=1 // pred_region
      %42 = dma.done [#allocation7], 1024
    $region21: #{tpu_custom_call.1} parent=1 // pred_fallthru
      _
    %p44 = scmp.eq.s32.totalorder 0, 0
    // Predicated region
    $region22: #{tpu_custom_call.1} parent=1 // pred_check
      %p45 = pneg %p44
    $region23: #{tpu_custom_call.1} parent=1 // pred_check_branch
      %47 = sbr.rel (%p45) target = $region25
    $region24: #{tpu_custom_call.1} parent=1 // pred_region
      %v48 = vld [vmem:[%s2] sm:$0x1]
      %v49 = vunpack.c.l.bf16 %v48
      %v50 = vlaneseq
      %v51 = vshrl.u32 %v50, 7
      %v52 = vsub.s32 0, %v51
      %v53 = vrot.slane %v49, %v52
      %54 = vst [vmem:[#allocation2] sm:$0xff] %v53
      %55 = vst [vmem:[#allocation2 + $0x8] sm:$0xff] %v53
    $region25: #{tpu_custom_call.1} parent=1 // pred_fallthru
      _
    %v56 = vld [vmem:[#allocation2] sm:$0xff]
    %v57 = vld [vmem:[#allocation2 + $0x8] sm:$0xff]
    %v58 = vld [vmem:[#allocation3] sm:$0xff]
    %v59 = vld [vmem:[#allocation3 + $0x8] sm:$0xff]
    %v60 = vpack.c.bf16 %v59, %v58
    %v61 = vld [vmem:[#allocation6] sm:$0xf]
    %v62 = vld [vmem:[#allocation6 + $0x4] sm:$0xf]
    %v63 = vld [vmem:[#allocation6 + $0x8] sm:$0xf]
    %v64 = vld [vmem:[#allocation6 + $0xc] sm:$0xf]
    %v65 = vld [vmem:[#allocation6 + $0x10] sm:$0xf]
    %v66 = vld [vmem:[#allocation6 + $0x14] sm:$0xf]
    %v67 = vld [vmem:[#allocation6 + $0x18] sm:$0xf]
    %v68 = vld [vmem:[#allocation6 + $0x1c] sm:$0xf]
    %v69 = vld [vmem:[#allocation6 + $0x20] sm:$0xf]
    %v70 = vld [vmem:[#allocation6 + $0x24] sm:$0xf]
    %v71 = vld [vmem:[#allocation6 + $0x28] sm:$0xf]
    %v72 = vld [vmem:[#allocation6 + $0x2c] sm:$0xf]
    %v73 = vld [vmem:[#allocation6 + $0x30] sm:$0xf]
    %v74 = vld [vmem:[#allocation6 + $0x34] sm:$0xf]
    %v75 = vld [vmem:[#allocation6 + $0x38] sm:$0xf]
    %v76 = vld [vmem:[#allocation6 + $0x3c] sm:$0xf]
    %v93 = vunpack.c.l.b16 %v61
    %v94 = vunpack.c.l.b16 %v62
    %v95 = vunpack.c.l.b16 %v63
    %v96 = vunpack.c.l.b16 %v64
    %v97 = vunpack.c.l.b16 %v65
    %v98 = vunpack.c.l.b16 %v66
    %v99 = vunpack.c.l.b16 %v67
    %v100 = vunpack.c.l.b16 %v68
    %v101 = vunpack.c.l.b16 %v69
    %v102 = vunpack.c.l.b16 %v70
    %v103 = vunpack.c.l.b16 %v71
    %v104 = vunpack.c.l.b16 %v72
    %v105 = vunpack.c.l.b16 %v73
    %v106 = vunpack.c.l.b16 %v74
    %v107 = vunpack.c.l.b16 %v75
    %v108 = vunpack.c.l.b16 %v76
    %v109 = vpack.c.b16 %v94, %v93
    %v110 = vpack.c.b16 %v96, %v95
    %v111 = vpack.c.b16 %v98, %v97
    %v112 = vpack.c.b16 %v100, %v99
    %v113 = vpack.c.b16 %v102, %v101
    %v114 = vpack.c.b16 %v104, %v103
    %v115 = vpack.c.b16 %v106, %v105
    %v116 = vpack.c.b16 %v108, %v107
    %125 = vmatprep.subr.bf16.mxu0 0
    %126 = vmatpush1.bf16.msra.mxu0 %v116
    %127 = vmatprep.subr.bf16.mxu0 0
    %128 = vmatpush1.bf16.msra.mxu0 %v115
    %129 = vmatprep.subr.bf16.mxu0 0
    %130 = vmatpush1.bf16.msra.mxu0 %v114
    %131 = vmatprep.subr.bf16.mxu0 0
    %132 = vmatpush1.bf16.msra.mxu0 %v113
    %133 = vmatprep.subr.bf16.mxu0 0
    %134 = vmatpush1.bf16.msra.mxu0 %v112
    %135 = vmatprep.subr.bf16.mxu0 0
    %136 = vmatpush1.bf16.msra.mxu0 %v111
    %137 = vmatprep.subr.bf16.mxu0 0
    %138 = vmatpush1.bf16.msra.mxu0 %v110
    %139 = vmatprep.subr.bf16.mxu0 0
    %140 = vmatpush1.bf16.msra.mxu0 %v109
    %141 = vmatprep.subr.bf16.mxu0 0
    %142 = vmatpush2.bf16.msra.mxu0 0
    %143 = vmatprep.subr.bf16.mxu0 0
    %144 = vmatpush2.bf16.msra.mxu0 0
    %145 = vmatprep.subr.bf16.mxu0 0
    %146 = vmatpush2.bf16.msra.mxu0 0
    %147 = vmatprep.subr.bf16.mxu0 0
    %148 = vmatpush2.bf16.msra.mxu0 0
    %149 = vmatprep.subr.bf16.mxu0 0
    %150 = vmatpush2.bf16.msra.mxu0 0
    %151 = vmatprep.subr.bf16.mxu0 0
    %152 = vmatpush2.bf16.msra.mxu0 0
    %153 = vmatprep.subr.bf16.mxu0 0
    %154 = vmatpush2.bf16.msra.mxu0 0
    %155 = vmatprep.subr.bf16.mxu0 0
    %156 = vmatpush2.bf16.msra.mxu0 0
    %157 = vmatprep.mubr.bf16.mxu0 0
    %158 = vmatmul.mubr.bf16.gmra.mxu0 %v60
    %v159 = vpop.f32.mrf.mxu0
    %v160 = vadd.f32 0.0, %v159
    %v161 = vpop.f32.mrf.mxu0
    %v162 = vpop.f32.mrf.mxu0
    %v163 = vadd.f32 0.0, %v162
    %v164 = vpop.f32.mrf.mxu0
    %165 = vdwg.mxu0
    %v166 = vadd.f32 %v56, %v160
    %v167 = vadd.f32 %v57, %v163
    %168 = vst [vmem:[#allocation2] sm:$0xff] %v166
    %169 = vst [vmem:[#allocation2 + $0x8] sm:$0xff] %v167
    // Predicated region
    $region26: #{tpu_custom_call.1} parent=1 // pred_check
      %p170 = pneg %p44
    $region27: #{tpu_custom_call.1} parent=1 // pred_check_branch
      %172 = sbr.rel (%p170) target = $region29
    $region28: #{tpu_custom_call.1} parent=1 // pred_region
      %v173 = vld [vmem:[#allocation2] sm:$0xff]
      %v174 = vld [vmem:[#allocation2 + $0x8] sm:$0xff]
      %v175 = vpack.c.bf16 %v174, %v173
      %v176 = vunpack.c.l.bf16 %v175
      %v177 = vunpack.c.h.bf16 %v175
      %178 = vst [vmem:[#allocation8] sm:$0xff] %v176
      %179 = vst [vmem:[#allocation8 + $0x8] sm:$0xff] %v177
    $region29: #{tpu_custom_call.1} parent=1 // pred_fallthru
      _
    // Predicated region
    $region30: #{tpu_custom_call.1} parent=1 // pred_check
      _
    $region31: #{tpu_custom_call.1} parent=1 // pred_check_branch
      %181 = sbr.rel (0) target = $region33
    $region32: #{tpu_custom_call.1} parent=1 // pred_region
      %s183 = ssub.s32 256, 256
      %184 = vsyncadd [#allocation5], %s183
      %s185 = sshll.u32 [#allocation8], 4
      %s186 = int_to_ptr.vmem [resolvable:$true] %s185
      %191 = dma.vmem_to_hbm [thread:$0]  %s186, 256, %s3, [#allocation5], 128, 128, 8
    $region33: #{tpu_custom_call.1} parent=1 // pred_fallthru
      _
    // Predicated region
    $region34: #{tpu_custom_call.1} parent=1 // pred_check
      _
    $region35: #{tpu_custom_call.1} parent=1 // pred_check_branch
      %193 = sbr.rel (0) target = $region37
    $region36: #{tpu_custom_call.1} parent=1 // pred_region
      %194 = dma.done [#allocation5], 256
    $region37: #{tpu_custom_call.1} parent=1 // pred_fallthru
      _
    %195 = vsyncpa [#allocation4], 1
    %196 = vsyncpa [#allocation7], 1
    %197 = vsyncpa [#allocation5], 1

</llo_original>
